<compile_context>
chip_gen: v7x
topology: tpu7x:2x2x1
jax: 0.10.0
libtpu: 0.0.40
codegen_flags: <defaults>
</compile_context>

<pallas_src>
import jax
import jax.numpy as jnp
from jax.experimental import pallas as pl
from jax.experimental.pallas import tpu as pltpu


def dqn_kernel(x_ref, w1_ref, b1_ref, w2_ref, b2_ref, w3_ref, b3_ref, o_ref):
    # In-kernel f32 -> bf16 cast of the activations (free on the VPU, halves x HBM read
    # vs. a wrapper-side cast pass).
    x = x_ref[...].astype(jnp.bfloat16)
    # fc1 + relu  (bf16 MXU inputs, f32 accumulation, f32 elementwise)
    h1 = jnp.dot(x, w1_ref[...], preferred_element_type=jnp.float32)
    h1 = jnp.maximum(h1 + b1_ref[...], 0.0)
    # fc2 + relu
    h2 = jnp.dot(h1.astype(jnp.bfloat16), w2_ref[...],
                 preferred_element_type=jnp.float32)
    h2 = jnp.maximum(h2 + b2_ref[...], 0.0)
    # fc3 (no activation); output block is the true (unpadded) width
    out = jnp.dot(h2.astype(jnp.bfloat16), w3_ref[...],
                  preferred_element_type=jnp.float32)
    o_ref[...] = (out + b3_ref[...]).astype(o_ref.dtype)


def _round_up(x, m):
    return ((x + m - 1) // m) * m


def _pick_batch_tile(batch, block_batch):
    """Batch tile: full extent for tiny batches; otherwise a multiple of 16 rows
    (bf16 packs 16 sublanes/vreg), capped at block_batch, and sized so there are
    at least 2 grid tiles (v7x megacore gets work on both TensorCores)."""
    if batch <= 16:
        return batch  # single full-extent tile, always layout-legal
    n_tiles = max(pl.cdiv(batch, block_batch), 2)
    return min(_round_up(pl.cdiv(batch, n_tiles), 16), _round_up(batch, 16))


def dqn_forward(x, w1, b1, w2, b2, w3, b3, *, block_batch=1024,
                out_dtype=jnp.float32):
    """Fused DQN forward. x: [B, in] (f32), w_i: [in_i, out_i], b_i: [1, out_i].

    Set out_dtype=jnp.bfloat16 if downstream accepts it (halves output writeback).
    """
    batch, input_dim = x.shape
    out_dim = w3.shape[1]

    tb = _pick_batch_tile(batch, block_batch)
    n_tiles = pl.cdiv(batch, tb)

    # bf16 MXU weights (tiny; no-op if params are already stored in bf16).
    # TODO(synk): for inference-style use, persist params in bf16 to remove these casts
    # from the per-call path entirely.
    w1_bf = w1.astype(jnp.bfloat16)
    w2_bf = w2.astype(jnp.bfloat16)
    w3_bf = w3.astype(jnp.bfloat16)
    b1 = b1.astype(jnp.float32)
    b2 = b2.astype(jnp.float32)
    b3 = b3.astype(jnp.float32)

    # weights / biases: single full-extent blocks, VMEM-resident for all grid steps
    def full(a):
        return pl.BlockSpec(a.shape, lambda i: (0,) * a.ndim)

    out = pl.pallas_call(
        dqn_kernel,
        out_shape=jax.ShapeDtypeStruct((batch, out_dim), out_dtype),
        grid=(n_tiles,),
        in_specs=[
            pl.BlockSpec((tb, input_dim), lambda i: (i, 0)),  # x: tiled over batch
            full(w1_bf), full(b1),
            full(w2_bf), full(b2),
            full(w3_bf), full(b3),
        ],
        # out_dim equals the full array extent -> unpadded, lane-masked store is cheap
        out_specs=pl.BlockSpec((tb, out_dim), lambda i: (i, 0)),
        compiler_params=pltpu.CompilerParams(
            # batch tiles are independent -> shard across v7x's 2 TensorCores
            dimension_semantics=("parallel",),
        ),
    )(x, w1_bf, b1, w2_bf, b2, w3_bf, b3)
    return out


def init_linear(key, fan_in, fan_out):
    # Deterministic init mimicking PyTorch nn.Linear default (uniform +/- 1/sqrt(fan_in)).
    kw, kb = jax.random.split(key)
    bound = 1.0 / jnp.sqrt(jnp.float32(fan_in))
    # Stored as [in, out] (transpose of PyTorch's [out, in]) for row-major matmul.
    w = jax.random.uniform(kw, (fan_in, fan_out), jnp.float32, -bound, bound)
    b = jax.random.uniform(kb, (1, fan_out), jnp.float32, -bound, bound)
    return w, b


def _ref_forward(x, w1, b1, w2, b2, w3, b3, cast_bf16):
    """Pure-JAX reference. If cast_bf16, mimic the kernel's bf16 MXU inputs."""
    def mm(a, w):
        if cast_bf16:
            a = a.astype(jnp.bfloat16)
            w = w.astype(jnp.bfloat16)
        return jnp.dot(a, w, preferred_element_type=jnp.float32)

    h1 = jnp.maximum(mm(x, w1) + b1, 0.0)
    h2 = jnp.maximum(mm(h1, w2) + b2, 0.0)
    return mm(h2, w3) + b3


if __name__ == "__main__":
    input_dim, hidden, output_dim = 32, 128, 8

    key = jax.random.PRNGKey(0)
    k_x, k1, k2, k3 = jax.random.split(key, 4)

    w1, b1 = init_linear(k1, input_dim, hidden)
    w2, b2 = init_linear(k2, hidden, hidden)
    w3, b3 = init_linear(k3, hidden, output_dim)

    # Case 1: tiny batch -> single full-extent tile.
    batch = 8
    x = jax.random.normal(k_x, (batch, input_dim), jnp.float32)
    out = jax.block_until_ready(dqn_forward(x, w1, b1, w2, b2, w3, b3))
    assert out.shape == (batch, output_dim)
    ref_bf = _ref_forward(x, w1, b1, w2, b2, w3, b3, cast_bf16=True)
    assert jnp.allclose(out, ref_bf, atol=1e-3, rtol=1e-3)
    ref_f32 = _ref_forward(x, w1, b1, w2, b2, w3, b3, cast_bf16=False)
    assert jnp.allclose(out, ref_f32, atol=5e-2, rtol=5e-2)

    # Case 2: tiny batch that is not a multiple of 8 (full-extent ragged-free tile).
    batch_s = 3
    xs = jax.random.normal(jax.random.PRNGKey(7), (batch_s, input_dim), jnp.float32)
    outs = jax.block_until_ready(dqn_forward(xs, w1, b1, w2, b2, w3, b3))
    assert outs.shape == (batch_s, output_dim)
    refs = _ref_forward(xs, w1, b1, w2, b2, w3, b3, cast_bf16=True)
    assert jnp.allclose(outs, refs, atol=1e-3, rtol=1e-3)

    # Case 3: batch not divisible by the tile -> exercises multi-tile grid with a
    # ragged (masked-write) last block and no wrapper-side pad/slice copies.
    batch2 = 260
    x2 = jax.random.normal(jax.random.PRNGKey(1), (batch2, input_dim), jnp.float32)
    out2 = jax.block_until_ready(dqn_forward(x2, w1, b1, w2, b2, w3, b3))
    assert out2.shape == (batch2, output_dim)
    ref2 = _ref_forward(x2, w1, b1, w2, b2, w3, b3, cast_bf16=True)
    assert jnp.allclose(out2, ref2, atol=1e-3, rtol=1e-3)
    assert bool(jnp.all(jnp.isfinite(out2)))

    print("KERNEL_OK")
</pallas_src>

<mosaic_0001>
module attributes {stable_mosaic.version = 11 : i64} {
  func.func @dqn_kernel(%arg0: i32, %arg1: memref<8x32xf32, #tpu.memory_space<vmem>>, %arg2: memref<32x128xbf16, #tpu.memory_space<vmem>>, %arg3: memref<1x128xf32, #tpu.memory_space<vmem>>, %arg4: memref<128x128xbf16, #tpu.memory_space<vmem>>, %arg5: memref<1x128xf32, #tpu.memory_space<vmem>>, %arg6: memref<128x8xbf16, #tpu.memory_space<vmem>>, %arg7: memref<1x8xf32, #tpu.memory_space<vmem>>, %arg8: memref<8x8xf32, #tpu.memory_space<vmem>>) attributes {dimension_semantics = [#tpu.dimension_semantics<parallel>], iteration_bounds = array<i64: 1>, scalar_prefetch = 0 : i64, scratch_operands = 0 : i64, tpu.core_type = #tpu.core_type<tc>, window_params = [{transform_indices = @transform_0, window_bounds = array<i64: 8, 32>}, {pipeline_mode = #tpu.pipeline_mode<synchronous>, transform_indices = @transform_1, window_bounds = array<i64: 32, 128>}, {pipeline_mode = #tpu.pipeline_mode<synchronous>, transform_indices = @transform_2, window_bounds = array<i64: 1, 128>}, {pipeline_mode = #tpu.pipeline_mode<synchronous>, transform_indices = @transform_3, window_bounds = array<i64: 128, 128>}, {pipeline_mode = #tpu.pipeline_mode<synchronous>, transform_indices = @transform_4, window_bounds = array<i64: 1, 128>}, {pipeline_mode = #tpu.pipeline_mode<synchronous>, transform_indices = @transform_5, window_bounds = array<i64: 128, 8>}, {pipeline_mode = #tpu.pipeline_mode<synchronous>, transform_indices = @transform_6, window_bounds = array<i64: 1, 8>}, {transform_indices = @transform_7, window_bounds = array<i64: 8, 8>}]} {
    %c0 = arith.constant 0 : index
    %c0_0 = arith.constant 0 : index
    %0 = vector.load %arg1[%c0, %c0_0] : memref<8x32xf32, #tpu.memory_space<vmem>>, vector<8x32xf32>
    %1 = arith.truncf %0 : vector<8x32xf32> to vector<8x32xbf16>
    %c0_1 = arith.constant 0 : index
    %c0_2 = arith.constant 0 : index
    %2 = vector.load %arg2[%c0_1, %c0_2] : memref<32x128xbf16, #tpu.memory_space<vmem>>, vector<32x128xbf16>
    %cst = arith.constant dense<0.000000e+00> : vector<8x128xf32>
    %3 = tpu.matmul %1, %2, %cst {dimension_numbers = #tpu.dot_dimension_numbers<[1], [0], [0], [1], [0, 0, 1, 1], [], []>} : vector<8x32xbf16>, vector<32x128xbf16>, vector<8x128xf32> -> vector<8x128xf32>
    %c0_3 = arith.constant 0 : index
    %c0_4 = arith.constant 0 : index
    %4 = vector.load %arg3[%c0_3, %c0_4] : memref<1x128xf32, #tpu.memory_space<vmem>>, vector<1x128xf32>
    %5 = vector.broadcast %4 : vector<1x128xf32> to vector<8x128xf32>
    %6 = arith.addf %3, %5 : vector<8x128xf32>
    %cst_5 = arith.constant 0.000000e+00 : f32
    %7 = vector.broadcast %cst_5 : f32 to vector<8x128xf32>
    %8 = arith.maximumf %6, %7 : vector<8x128xf32>
    %9 = arith.truncf %8 : vector<8x128xf32> to vector<8x128xbf16>
    %c0_6 = arith.constant 0 : index
    %c0_7 = arith.constant 0 : index
    %10 = vector.load %arg4[%c0_6, %c0_7] : memref<128x128xbf16, #tpu.memory_space<vmem>>, vector<128x128xbf16>
    %cst_8 = arith.constant dense<0.000000e+00> : vector<8x128xf32>
    %11 = tpu.matmul %9, %10, %cst_8 {dimension_numbers = #tpu.dot_dimension_numbers<[1], [0], [0], [1], [0, 0, 1, 1], [], []>} : vector<8x128xbf16>, vector<128x128xbf16>, vector<8x128xf32> -> vector<8x128xf32>
    %c0_9 = arith.constant 0 : index
    %c0_10 = arith.constant 0 : index
    %12 = vector.load %arg5[%c0_9, %c0_10] : memref<1x128xf32, #tpu.memory_space<vmem>>, vector<1x128xf32>
    %13 = vector.broadcast %12 : vector<1x128xf32> to vector<8x128xf32>
    %14 = arith.addf %11, %13 : vector<8x128xf32>
    %cst_11 = arith.constant 0.000000e+00 : f32
    %15 = vector.broadcast %cst_11 : f32 to vector<8x128xf32>
    %16 = arith.maximumf %14, %15 : vector<8x128xf32>
    %17 = arith.truncf %16 : vector<8x128xf32> to vector<8x128xbf16>
    %c0_12 = arith.constant 0 : index
    %c0_13 = arith.constant 0 : index
    %18 = vector.load %arg6[%c0_12, %c0_13] : memref<128x8xbf16, #tpu.memory_space<vmem>>, vector<128x8xbf16>
    %cst_14 = arith.constant dense<0.000000e+00> : vector<8x8xf32>
    %19 = tpu.matmul %17, %18, %cst_14 {dimension_numbers = #tpu.dot_dimension_numbers<[1], [0], [0], [1], [0, 0, 1, 1], [], []>} : vector<8x128xbf16>, vector<128x8xbf16>, vector<8x8xf32> -> vector<8x8xf32>
    %c0_15 = arith.constant 0 : index
    %c0_16 = arith.constant 0 : index
    %20 = vector.load %arg7[%c0_15, %c0_16] : memref<1x8xf32, #tpu.memory_space<vmem>>, vector<1x8xf32>
    %21 = vector.broadcast %20 : vector<1x8xf32> to vector<8x8xf32>
    %22 = arith.addf %19, %21 : vector<8x8xf32>
    %c0_17 = arith.constant 0 : index
    %c0_18 = arith.constant 0 : index
    %23 = vector.load %arg8[%c0_17, %c0_18] : memref<8x8xf32, #tpu.memory_space<vmem>>, vector<8x8xf32>
    tpu.vector_store %arg8[%c0_17, %c0_18], %22 {strides = array<i32>} : memref<8x8xf32, #tpu.memory_space<vmem>>, vector<8x8xf32>,
    return
  }
  func.func @transform_0(%arg0: i32) -> (i32, i32) {
    %c0_i32 = arith.constant 0 : i32
    %c0_i32_0 = arith.constant 0 : i32
    return %arg0, %c0_i32 : i32, i32
  }
  func.func @transform_1(%arg0: i32) -> (i32, i32) {
    %c0_i32 = arith.constant 0 : i32
    %c0_i32_0 = arith.constant 0 : i32
    %c0_i32_1 = arith.constant 0 : i32
    return %c0_i32, %c0_i32_0 : i32, i32
  }
  func.func @transform_2(%arg0: i32) -> (i32, i32) {
    %c0_i32 = arith.constant 0 : i32
    %c0_i32_0 = arith.constant 0 : i32
    %c0_i32_1 = arith.constant 0 : i32
    return %c0_i32, %c0_i32_0 : i32, i32
  }
  func.func @transform_3(%arg0: i32) -> (i32, i32) {
    %c0_i32 = arith.constant 0 : i32
    %c0_i32_0 = arith.constant 0 : i32
    %c0_i32_1 = arith.constant 0 : i32
    return %c0_i32, %c0_i32_0 : i32, i32
  }
  func.func @transform_4(%arg0: i32) -> (i32, i32) {
    %c0_i32 = arith.constant 0 : i32
    %c0_i32_0 = arith.constant 0 : i32
    %c0_i32_1 = arith.constant 0 : i32
    return %c0_i32, %c0_i32_0 : i32, i32
  }
  func.func @transform_5(%arg0: i32) -> (i32, i32) {
    %c0_i32 = arith.constant 0 : i32
    %c0_i32_0 = arith.constant 0 : i32
    %c0_i32_1 = arith.constant 0 : i32
    return %c0_i32, %c0_i32_0 : i32, i32
  }
  func.func @transform_6(%arg0: i32) -> (i32, i32) {
    %c0_i32 = arith.constant 0 : i32
    %c0_i32_0 = arith.constant 0 : i32
    %c0_i32_1 = arith.constant 0 : i32
    return %c0_i32, %c0_i32_0 : i32, i32
  }
  func.func @transform_7(%arg0: i32) -> (i32, i32) {
    %c0_i32 = arith.constant 0 : i32
    %c0_i32_0 = arith.constant 0 : i32
    return %arg0, %c0_i32 : i32, i32
  }
}

</mosaic_0001>

<llo_original>
// kernel: tpu_custom_call.1
$region0: #{tpu_custom_call.1}
  #allocation0 [shape = 'u32[]', space=smem, size = 0x4, offset = 0x4, fixed_abs, tag = 'smem constant byte address 0x4 - core index']
  #allocation1 [shape = 'u32[144,128]{1,0:T(1,128)}', space=vmem, size = 0x12000, scoped, tag = 'internal scratch']
  %s0 = inlined_call_operand.vmem [shape: f32[8,32], index: 0, kind: input, shape index: {}]
  %s1 = inlined_call_operand.hbm [shape: bf16[32,128], index: 1, kind: input, shape index: {}]
  %s2 = inlined_call_operand.vmem [shape: f32[1,128], index: 2, kind: input, shape index: {}]
  %s3 = inlined_call_operand.vmem [shape: bf16[128,128], index: 3, kind: input, shape index: {}]
  %s4 = inlined_call_operand.vmem [shape: f32[1,128], index: 4, kind: input, shape index: {}]
  %s5 = inlined_call_operand.vmem [shape: bf16[128,8], index: 5, kind: input, shape index: {}]
  %s6 = inlined_call_operand.vmem [shape: f32[1,8], index: 6, kind: input, shape index: {}]
  %s7 = inlined_call_operand.hbm [shape: f32[8,8], index: 7, kind: output, shape index: {}]
  %s8 = sld [smem:[#allocation0]]
  $region42: #{tpu_custom_call.1} parent=0
    _
  %s10 = ssub.s32 1, %s8
  %s11 = scalar_select 0, %s10, %s8
  $region1: #{tpu_custom_call.1} parent=0
    #allocation2 [shape = 'u8[8192]{0}', space=vmem, size = 0x2000, scoped, tag = 'input window, operand 1, single buffered']
    #allocation3 [shape = 's32[1]{0}', space=sflag, size = 0x4, scoped, tag = 'scoped memory for tpu_custom_call.1']
    #allocation4 [shape = 's32[1]{0}', space=sflag, size = 0x4, scoped, tag = 'scoped memory for tpu_custom_call.1']
    #allocation5 [shape = 'u8[4096]{0}', space=vmem, size = 0x1000, scoped, tag = 'output window, operand 0, single buffered']
    %12 = vsyncpa [#allocation3], 0
    %13 = vsyncpa [#allocation4], 0
    // Predicated region
    $region2: #{tpu_custom_call.1} parent=1 // pred_check
      _
    $region3: #{tpu_custom_call.1} parent=1 // pred_check_branch
      %15 = sbr.rel (0) target = $region5
    $region4: #{tpu_custom_call.1} parent=1 // pred_region
      _
    $region5: #{tpu_custom_call.1} parent=1 // pred_fallthru
      _
    // Predicated region
    $region6: #{tpu_custom_call.1} parent=1 // pred_check
      _
    $region7: #{tpu_custom_call.1} parent=1 // pred_check_branch
      %17 = sbr.rel (0) target = $region9
    $region8: #{tpu_custom_call.1} parent=1 // pred_region
      %s19 = ssub.s32 256, 256
      %20 = vsyncadd [#allocation3], %s19
      %s21 = sshll.u32 [#allocation2], 4
      %s22 = int_to_ptr.vmem [resolvable:$true] %s21
      %27 = dma.hbm_to_vmem [thread:$0]  %s1, 256, %s22, [#allocation3], 64, 64, 4
    $region9: #{tpu_custom_call.1} parent=1 // pred_fallthru
      _
    // Predicated region
    $region10: #{tpu_custom_call.1} parent=1 // pred_check
      _
    $region11: #{tpu_custom_call.1} parent=1 // pred_check_branch
      %29 = sbr.rel (0) target = $region13
    $region12: #{tpu_custom_call.1} parent=1 // pred_region
      _
    $region13: #{tpu_custom_call.1} parent=1 // pred_fallthru
      _
    // Predicated region
    $region14: #{tpu_custom_call.1} parent=1 // pred_check
      _
    $region15: #{tpu_custom_call.1} parent=1 // pred_check_branch
      %31 = sbr.rel (0) target = $region17
    $region16: #{tpu_custom_call.1} parent=1 // pred_region
      _
    $region17: #{tpu_custom_call.1} parent=1 // pred_fallthru
      _
    // Predicated region
    $region18: #{tpu_custom_call.1} parent=1 // pred_check
      _
    $region19: #{tpu_custom_call.1} parent=1 // pred_check_branch
      %33 = sbr.rel (0) target = $region21
    $region20: #{tpu_custom_call.1} parent=1 // pred_region
      _
    $region21: #{tpu_custom_call.1} parent=1 // pred_fallthru
      _
    // Predicated region
    $region22: #{tpu_custom_call.1} parent=1 // pred_check
      _
    $region23: #{tpu_custom_call.1} parent=1 // pred_check_branch
      %35 = sbr.rel (0) target = $region25
    $region24: #{tpu_custom_call.1} parent=1 // pred_region
      _
    $region25: #{tpu_custom_call.1} parent=1 // pred_fallthru
      _
    // Predicated region
    $region26: #{tpu_custom_call.1} parent=1 // pred_check
      _
    $region27: #{tpu_custom_call.1} parent=1 // pred_check_branch
      %37 = sbr.rel (0) target = $region29
    $region28: #{tpu_custom_call.1} parent=1 // pred_region
      _
    $region29: #{tpu_custom_call.1} parent=1 // pred_fallthru
      _
    // Predicated region
    $region30: #{tpu_custom_call.1} parent=1 // pred_check
      _
    $region31: #{tpu_custom_call.1} parent=1 // pred_check_branch
      %39 = sbr.rel (0) target = $region33
    $region32: #{tpu_custom_call.1} parent=1 // pred_region
      %40 = dma.done [#allocation3], 256
    $region33: #{tpu_custom_call.1} parent=1 // pred_fallthru
      _
    %v42 = vld [vmem:[%s0] sm:$0xff]
    %v43 = vpack.c.bf16 %v42, %v42
    %v44 = vld [vmem:[#allocation2] sm:$0xf]
    %v45 = vld [vmem:[#allocation2 + $0x4] sm:$0xf]
    %v46 = vld [vmem:[#allocation2 + $0x8] sm:$0xf]
    %v47 = vld [vmem:[#allocation2 + $0xc] sm:$0xf]
    %v48 = vld [vmem:[%s2] sm:$0x1]
    %v50 = vlaneseq
    %v51 = vshrl.u32 %v50, 7
    %v52 = vsub.s32 0, %v51
    %v53 = vrot.slane %v48, %v52
    %v59 = vunpack.c.l.b16 %v44
    %v60 = vunpack.c.l.b16 %v45
    %v61 = vunpack.c.l.b16 %v46
    %v62 = vunpack.c.l.b16 %v47
    %v63 = vpack.c.b16 %v60, %v59
    %v64 = vpack.c.b16 %v62, %v61
    %vm67 = vcmask 261120
    %v69 = vsel %vm67, %v43, 0
    %71 = vmatprep.subr.bf16.mxu0 0
    %72 = vmatpush1.bf16.msra.mxu0 %v63
    %73 = vmatprep.subr.bf16.mxu0 0
    %74 = vmatpush1.bf16.msra.mxu0 %v64
    %75 = vmatprep.subr.bf16.mxu0 0
    %76 = vmatpush1.bf16.msra.mxu0 0
    %77 = vmatprep.subr.bf16.mxu0 0
    %78 = vmatpush1.bf16.msra.mxu0 0
    %79 = vmatprep.subr.bf16.mxu0 0
    %80 = vmatpush1.bf16.msra.mxu0 0
    %81 = vmatprep.subr.bf16.mxu0 0
    %82 = vmatpush1.bf16.msra.mxu0 0
    %83 = vmatprep.subr.bf16.mxu0 0
    %84 = vmatpush1.bf16.msra.mxu0 0
    %85 = vmatprep.subr.bf16.mxu0 0
    %86 = vmatpush1.bf16.msra.mxu0 0
    %87 = vmatprep.subr.bf16.mxu0 0
    %88 = vmatpush1.bf16.msra.mxu0 0
    %89 = vmatprep.subr.bf16.mxu0 0
    %90 = vmatpush1.bf16.msra.mxu0 0
    %91 = vmatprep.subr.bf16.mxu0 0
    %92 = vmatpush1.bf16.msra.mxu0 0
    %93 = vmatprep.subr.bf16.mxu0 0
    %94 = vmatpush1.bf16.msra.mxu0 0
    %95 = vmatprep.subr.bf16.mxu0 0
    %96 = vmatpush1.bf16.msra.mxu0 0
    %97 = vmatprep.subr.bf16.mxu0 0
    %98 = vmatpush1.bf16.msra.mxu0 0
    %99 = vmatprep.subr.bf16.mxu0 0
    %100 = vmatpush1.bf16.msra.mxu0 0
    %101 = vmatprep.subr.bf16.mxu0 0
    %102 = vmatpush1.bf16.msra.mxu0 0
    %103 = vmatprep.mubr.bf16.mxu0 0
    %104 = vmatmul.mubr.bf16.gmra.mrb[0].mxu0 %v69
    %v105 = vpop.f32.mrb[0].mxu0
    %v106 = vadd.f32 %v53, %v105
    %v107 = vpop.f32.mrb[0].mxu0
    %v108 = vpop.f32.mrb[0].mxu0
    %v109 = vpop.f32.mrb[0].mxu0
    %110 = vdwg.mxu0
    %v111 = vmax.f32 %v106, 0.0
    %v112 = vpack.c.bf16 %v111, %v111
    %v113 = vld [vmem:[%s3] sm:$0xf]
    %v114 = vld [vmem:[%s3 + $0x4] sm:$0xf]
    %v115 = vld [vmem:[%s3 + $0x8] sm:$0xf]
    %v116 = vld [vmem:[%s3 + $0xc] sm:$0xf]
    %v117 = vld [vmem:[%s3 + $0x10] sm:$0xf]
    %v118 = vld [vmem:[%s3 + $0x14] sm:$0xf]
    %v119 = vld [vmem:[%s3 + $0x18] sm:$0xf]
    %v120 = vld [vmem:[%s3 + $0x1c] sm:$0xf]
    %v121 = vld [vmem:[%s3 + $0x20] sm:$0xf]
    %v122 = vld [vmem:[%s3 + $0x24] sm:$0xf]
    %v123 = vld [vmem:[%s3 + $0x28] sm:$0xf]
    %v124 = vld [vmem:[%s3 + $0x2c] sm:$0xf]
    %v125 = vld [vmem:[%s3 + $0x30] sm:$0xf]
    %v126 = vld [vmem:[%s3 + $0x34] sm:$0xf]
    %v127 = vld [vmem:[%s3 + $0x38] sm:$0xf]
    %v128 = vld [vmem:[%s3 + $0x3c] sm:$0xf]
    %v129 = vld [vmem:[%s4] sm:$0x1]
    %v131 = vlaneseq
    %v132 = vshrl.u32 %v131, 7
    %v133 = vsub.s32 0, %v132
    %v134 = vrot.slane %v129, %v133
    %v152 = vunpack.c.l.b16 %v113
    %v153 = vunpack.c.l.b16 %v114
    %v154 = vunpack.c.l.b16 %v115
    %v155 = vunpack.c.l.b16 %v116
    %v156 = vunpack.c.l.b16 %v117
    %v157 = vunpack.c.l.b16 %v118
    %v158 = vunpack.c.l.b16 %v119
    %v159 = vunpack.c.l.b16 %v120
    %v160 = vunpack.c.l.b16 %v121
    %v161 = vunpack.c.l.b16 %v122
    %v162 = vunpack.c.l.b16 %v123
    %v163 = vunpack.c.l.b16 %v124
    %v164 = vunpack.c.l.b16 %v125
    %v165 = vunpack.c.l.b16 %v126
    %v166 = vunpack.c.l.b16 %v127
    %v167 = vunpack.c.l.b16 %v128
    %v168 = vpack.c.b16 %v153, %v152
    %v169 = vpack.c.b16 %v155, %v154
    %v170 = vpack.c.b16 %v157, %v156
    %v171 = vpack.c.b16 %v159, %v158
    %v172 = vpack.c.b16 %v161, %v160
    %v173 = vpack.c.b16 %v163, %v162
    %v174 = vpack.c.b16 %v165, %v164
    %v175 = vpack.c.b16 %v167, %v166
    %184 = vmatprep.subr.bf16.mxu0 0
    %185 = vmatpush1.bf16.msra.mxu0 %v168
    %186 = vmatprep.subr.bf16.mxu0 0
    %187 = vmatpush1.bf16.msra.mxu0 %v169
    %188 = vmatprep.subr.bf16.mxu0 0
    %189 = vmatpush1.bf16.msra.mxu0 %v170
    %190 = vmatprep.subr.bf16.mxu0 0
    %191 = vmatpush1.bf16.msra.mxu0 %v171
    %192 = vmatprep.subr.bf16.mxu0 0
    %193 = vmatpush1.bf16.msra.mxu0 %v172
    %194 = vmatprep.subr.bf16.mxu0 0
    %195 = vmatpush1.bf16.msra.mxu0 %v173
    %196 = vmatprep.subr.bf16.mxu0 0
    %197 = vmatpush1.bf16.msra.mxu0 %v174
    %198 = vmatprep.subr.bf16.mxu0 0
    %199 = vmatpush1.bf16.msra.mxu0 %v175
    %200 = vmatprep.subr.bf16.mxu0 0
    %201 = vmatpush1.bf16.msra.mxu0 0
    %202 = vmatprep.subr.bf16.mxu0 0
    %203 = vmatpush1.bf16.msra.mxu0 0
    %204 = vmatprep.subr.bf16.mxu0 0
    %205 = vmatpush1.bf16.msra.mxu0 0
    %206 = vmatprep.subr.bf16.mxu0 0
    %207 = vmatpush1.bf16.msra.mxu0 0
    %208 = vmatprep.subr.bf16.mxu0 0
    %209 = vmatpush1.bf16.msra.mxu0 0
    %210 = vmatprep.subr.bf16.mxu0 0
    %211 = vmatpush1.bf16.msra.mxu0 0
    %212 = vmatprep.subr.bf16.mxu0 0
    %213 = vmatpush1.bf16.msra.mxu0 0
    %214 = vmatprep.subr.bf16.mxu0 0
    %215 = vmatpush1.bf16.msra.mxu0 0
    %216 = vmatprep.mubr.bf16.mxu0 0
    %217 = vmatmul.mubr.bf16.gmra.mrb[0].mxu0 %v112
    %v218 = vpop.f32.mrb[0].mxu0
    %v219 = vadd.f32 %v134, %v218
    %v220 = vpop.f32.mrb[0].mxu0
    %v221 = vpop.f32.mrb[0].mxu0
    %v222 = vpop.f32.mrb[0].mxu0
    %223 = vdwg.mxu0
    %v224 = vmax.f32 %v219, 0.0
    %v225 = vpack.c.bf16 %v224, %v224
    %v226 = vld [vmem:[%s5] sm:$0xf]
    %v227 = vld [vmem:[%s5 + $0x4] sm:$0xf]
    %v228 = vld [vmem:[%s5 + $0x8] sm:$0xf]
    %v229 = vld [vmem:[%s5 + $0xc] sm:$0xf]
    %v230 = vld [vmem:[%s5 + $0x10] sm:$0xf]
    %v231 = vld [vmem:[%s5 + $0x14] sm:$0xf]
    %v232 = vld [vmem:[%s5 + $0x18] sm:$0xf]
    %v233 = vld [vmem:[%s5 + $0x1c] sm:$0xf]
    %v234 = vld [vmem:[%s5 + $0x20] sm:$0xf]
    %v235 = vld [vmem:[%s5 + $0x24] sm:$0xf]
    %v236 = vld [vmem:[%s5 + $0x28] sm:$0xf]
    %v237 = vld [vmem:[%s5 + $0x2c] sm:$0xf]
    %v238 = vld [vmem:[%s5 + $0x30] sm:$0xf]
    %v239 = vld [vmem:[%s5 + $0x34] sm:$0xf]
    %v240 = vld [vmem:[%s5 + $0x38] sm:$0xf]
    %v241 = vld [vmem:[%s5 + $0x3c] sm:$0xf]
    %v242 = vld [vmem:[%s6] sm:$0x1]
    %v244 = vlaneseq
    %v245 = vshrl.u32 %v244, 7
    %v246 = vsub.s32 0, %v245
    %v247 = vrot.slane %v242, %v246
    %v265 = vunpack.c.l.b16 %v226
    %v266 = vunpack.c.l.b16 %v227
    %v267 = vunpack.c.l.b16 %v228
    %v268 = vunpack.c.l.b16 %v229
    %v269 = vunpack.c.l.b16 %v230
    %v270 = vunpack.c.l.b16 %v231
    %v271 = vunpack.c.l.b16 %v232
    %v272 = vunpack.c.l.b16 %v233
    %v273 = vunpack.c.l.b16 %v234
    %v274 = vunpack.c.l.b16 %v235
    %v275 = vunpack.c.l.b16 %v236
    %v276 = vunpack.c.l.b16 %v237
    %v277 = vunpack.c.l.b16 %v238
    %v278 = vunpack.c.l.b16 %v239
    %v279 = vunpack.c.l.b16 %v240
    %v280 = vunpack.c.l.b16 %v241
    %v281 = vpack.c.b16 %v266, %v265
    %v282 = vpack.c.b16 %v268, %v267
    %v283 = vpack.c.b16 %v270, %v269
    %v284 = vpack.c.b16 %v272, %v271
    %v285 = vpack.c.b16 %v274, %v273
    %v286 = vpack.c.b16 %v276, %v275
    %v287 = vpack.c.b16 %v278, %v277
    %v288 = vpack.c.b16 %v280, %v279
    %297 = vmatprep.subr.bf16.mxu0 0
    %298 = vmatpush1.bf16.msra.mxu0 %v281
    %299 = vmatprep.subr.bf16.mxu0 0
    %300 = vmatpush1.bf16.msra.mxu0 %v282
    %301 = vmatprep.subr.bf16.mxu0 0
    %302 = vmatpush1.bf16.msra.mxu0 %v283
    %303 = vmatprep.subr.bf16.mxu0 0
    %304 = vmatpush1.bf16.msra.mxu0 %v284
    %305 = vmatprep.subr.bf16.mxu0 0
    %306 = vmatpush1.bf16.msra.mxu0 %v285
    %307 = vmatprep.subr.bf16.mxu0 0
    %308 = vmatpush1.bf16.msra.mxu0 %v286
    %309 = vmatprep.subr.bf16.mxu0 0
    %310 = vmatpush1.bf16.msra.mxu0 %v287
    %311 = vmatprep.subr.bf16.mxu0 0
    %312 = vmatpush1.bf16.msra.mxu0 %v288
    %313 = vmatprep.subr.bf16.mxu0 0
    %314 = vmatpush1.bf16.msra.mxu0 0
    %315 = vmatprep.subr.bf16.mxu0 0
    %316 = vmatpush1.bf16.msra.mxu0 0
    %317 = vmatprep.subr.bf16.mxu0 0
    %318 = vmatpush1.bf16.msra.mxu0 0
    %319 = vmatprep.subr.bf16.mxu0 0
    %320 = vmatpush1.bf16.msra.mxu0 0
    %321 = vmatprep.subr.bf16.mxu0 0
    %322 = vmatpush1.bf16.msra.mxu0 0
    %323 = vmatprep.subr.bf16.mxu0 0
    %324 = vmatpush1.bf16.msra.mxu0 0
    %325 = vmatprep.subr.bf16.mxu0 0
    %326 = vmatpush1.bf16.msra.mxu0 0
    %327 = vmatprep.subr.bf16.mxu0 0
    %328 = vmatpush1.bf16.msra.mxu0 0
    %329 = vmatprep.mubr.bf16.mxu0 0
    %330 = vmatmul.mubr.bf16.gmra.mrb[0].mxu0 %v225
    %v331 = vpop.f32.mrb[0].mxu0
    %v332 = vadd.f32 %v247, %v331
    %v333 = vpop.f32.mrb[0].mxu0
    %v334 = vpop.f32.mrb[0].mxu0
    %v335 = vpop.f32.mrb[0].mxu0
    %336 = vdwg.mxu0
    %vm337 = vcmask 64512
    %338 = vst.msk [vmem:[#allocation5] sm:$0xff] %vm337, %v332
    // Predicated region
    $region34: #{tpu_custom_call.1} parent=1 // pred_check
      _
    $region35: #{tpu_custom_call.1} parent=1 // pred_check_branch
      %340 = sbr.rel (0) target = $region37
    $region36: #{tpu_custom_call.1} parent=1 // pred_region
      %s342 = ssub.s32 128, 128
      %343 = vsyncadd [#allocation4], %s342
      %s345 = sshll.u32 [#allocation5], 4
      %s346 = int_to_ptr.vmem [resolvable:$true] %s345
      %348 = dma.vmem_to_hbm [thread:$0]  %s346, 128, %s7, [#allocation4]
    $region37: #{tpu_custom_call.1} parent=1 // pred_fallthru
      _
    // Predicated region
    $region38: #{tpu_custom_call.1} parent=1 // pred_check
      _
    $region39: #{tpu_custom_call.1} parent=1 // pred_check_branch
      %350 = sbr.rel (0) target = $region41
    $region40: #{tpu_custom_call.1} parent=1 // pred_region
      %351 = dma.done [#allocation4], 128
    $region41: #{tpu_custom_call.1} parent=1 // pred_fallthru
      _
    %352 = vsyncpa [#allocation3], 1
    %353 = vsyncpa [#allocation4], 1

</llo_original>
